<compile_context>
chip_gen: v6e
topology: v6e:2x2x1
jax: 0.10.0
libtpu: 0.0.40
codegen_flags: <defaults>
</compile_context>

<pallas_src>
import functools
from typing import NamedTuple

import jax
import jax.numpy as jnp
from jax.experimental import pallas as pl
from jax.experimental.pallas import tpu as pltpu


# ---------------------------------------------------------------------------
# Kernel
# ---------------------------------------------------------------------------
def lstm_cell_kernel(x_ref, h_ref, wx_ref, wh_ref, b_ref, c_ref,
                     hy_ref, cy_ref, *, th):
    # x_ref  : (tb, I_pad)        f32 input tile
    # h_ref  : (tb, H_pad)        f32 previous hidden tile (full width)
    # wx_ref : (I_pad, 4*th)      tile-interleaved x->gates weights (compute dtype)
    # wh_ref : (H_pad, 4*th)      tile-interleaved h->gates weights (compute dtype)
    # b_ref  : (1, 4*th)          fused bias (bx + bh), f32
    # c_ref  : (tb, th)           previous cell-state tile, f32
    wdt = wx_ref.dtype
    x = x_ref[...].astype(wdt)
    h = h_ref[...].astype(wdt)

    # One wide MXU contraction per operand (gate axis fused -> 4*th output
    # columns), accumulated in f32; single sublane-broadcast bias add.
    gates = jnp.dot(x, wx_ref[...], preferred_element_type=jnp.float32)
    gates = gates + jnp.dot(h, wh_ref[...], preferred_element_type=jnp.float32)
    gates = gates + b_ref[...]

    def sigmoid(z):
        # sigmoid(x) == 0.5 * tanh(0.5 * x) + 0.5  -> one EUP op per gate.
        return 0.5 * jnp.tanh(0.5 * z) + 0.5

    ingate = sigmoid(gates[:, 0 * th:1 * th])
    forgetgate = sigmoid(gates[:, 1 * th:2 * th])
    cellgate = jnp.tanh(gates[:, 2 * th:3 * th])
    outgate = sigmoid(gates[:, 3 * th:4 * th])

    cy = c_ref[...] * forgetgate + ingate * cellgate
    hy = outgate * jnp.tanh(cy)

    cy_ref[...] = cy.astype(cy_ref.dtype)
    hy_ref[...] = hy.astype(hy_ref.dtype)


# ---------------------------------------------------------------------------
# Parameter preparation (done ONCE, outside the step)
# ---------------------------------------------------------------------------
class LSTMCellParams(NamedTuple):
    wx: jax.Array       # (I_pad, 4*H_pad)  tile-interleaved, compute dtype
    wh: jax.Array       # (H_pad, 4*H_pad)  tile-interleaved, compute dtype
    b: jax.Array        # (1, 4*H_pad)      f32, same interleaving
    input_size: int
    hidden_size: int
    th: int             # hidden tile size (multiple of 128, divides H_pad)


def _round_up(x, m):
    return (x + m - 1) // m * m


def _pick_hidden_tile(h_pad, block_h, k_rows, itemsize, budget_bytes):
    """Largest multiple of 128 that divides h_pad, <= block_h, and whose
    per-buffer weight block (k_rows x 4*th) fits in budget_bytes."""
    t = max(128, (min(block_h, h_pad) // 128) * 128)
    while h_pad % t:
        t -= 128
    while t > 128 and k_rows * 4 * t * itemsize > budget_bytes:
        t -= 128
        while h_pad % t:
            t -= 128
    return t


def _interleave_weight(w, h, h_pad, th, k, k_pad, dtype):
    """w: (4H, K) torch Linear layout -> (K_pad, 4*H_pad), gates interleaved
    per hidden tile: columns [tile j | g0, g1, g2, g3]."""
    n_t = h_pad // th
    w = w.reshape(4, h, k)
    w = jnp.pad(w, ((0, 0), (0, h_pad - h), (0, k_pad - k)))
    w = w.reshape(4, n_t, th, k_pad)
    w = jnp.transpose(w, (3, 1, 0, 2))          # (K_pad, n_t, 4, th)
    return w.reshape(k_pad, 4 * h_pad).astype(dtype)


def _interleave_bias(b, h, h_pad, th):
    n_t = h_pad // th
    b = b.reshape(4, h)
    b = jnp.pad(b, ((0, 0), (0, h_pad - h)))
    b = b.reshape(4, n_t, th)
    b = jnp.transpose(b, (1, 0, 2))             # (n_t, 4, th)
    return b.reshape(1, 4 * h_pad).astype(jnp.float32)


def prepare_params(wx, wh, bx, bh, *, compute_dtype=jnp.bfloat16,
                   block_h=512, weight_block_budget_bytes=12 << 20):
    """wx: (4H, I), wh: (4H, H), bx/bh: (4H,) -> fused, tile-interleaved params.

    Done once; no per-step HBM transposes/reshapes of the weights.
    """
    four_h, input_size = wx.shape
    hidden_size = wh.shape[1]
    assert four_h == 4 * hidden_size

    i_pad = _round_up(input_size, 128)
    h_pad = _round_up(hidden_size, 128)
    itemsize = jnp.dtype(compute_dtype).itemsize
    th = _pick_hidden_tile(h_pad, block_h, i_pad + h_pad, itemsize,
                           weight_block_budget_bytes)

    wx_i = _interleave_weight(wx, hidden_size, h_pad, th,
                              input_size, i_pad, compute_dtype)
    wh_i = _interleave_weight(wh, hidden_size, h_pad, th,
                              hidden_size, h_pad, compute_dtype)
    b_i = _interleave_bias(bx + bh, hidden_size, h_pad, th)
    return LSTMCellParams(wx_i, wh_i, b_i, input_size, hidden_size, th)


# ---------------------------------------------------------------------------
# Wrapper
# ---------------------------------------------------------------------------
def _pad_to(a, shape):
    pads = [(0, s - d) for d, s in zip(a.shape, shape)]
    if all(p == (0, 0) for p in pads):
        return a
    return jnp.pad(a, pads)


def lstm_cell(x, hx, cx, params: LSTMCellParams, *, block_b=256):
    """One LSTMCell step.

    x: (B, I) f32; hx/cx: (B, H) f32 (pass zeros for the hx=None default path).
    Returns hy, cy: (B, H) f32.
    """
    B, I = x.shape
    H = params.hidden_size
    assert I == params.input_size and hx.shape == (B, H) and cx.shape == (B, H)

    th = params.th
    i_pad = params.wx.shape[0]
    h_pad = params.wh.shape[0]
    wdt = params.wx.dtype
    witem = jnp.dtype(wdt).itemsize

    tb = min(_round_up(B, 8), max(8, (block_b // 8) * 8))
    b_pad = _round_up(B, tb)

    # For shape-aligned inputs (B % 8 == 0, I/H % 128 == 0) these are no-ops,
    # so no wrapper-side HBM copy is issued.
    x_p = _pad_to(x, (b_pad, i_pad))
    hx_p = _pad_to(hx, (b_pad, h_pad))
    cx_p = _pad_to(cx, (b_pad, h_pad))

    n_h = h_pad // th
    n_b = b_pad // tb
    grid = (n_h, n_b)  # hidden OUTER (weights stay resident), batch INNER

    # VMEM budget from actual double-buffered block footprint (+ headroom),
    # capped so it also fits v7x's 64 MiB physical VMEM per TensorCore.
    w_bytes = (i_pad + h_pad) * 4 * th * witem
    act_bytes = tb * (i_pad + h_pad) * 4
    misc_bytes = 4 * th * 4 + 3 * tb * th * 4          # bias + c + 2 outputs
    needed = 2 * (w_bytes + act_bytes + misc_bytes)     # double-buffered
    vmem_limit = min(max(2 * needed + (4 << 20), 32 << 20), 56 << 20)

    hy_p, cy_p = pl.pallas_call(
        functools.partial(lstm_cell_kernel, th=th),
        out_shape=(
            jax.ShapeDtypeStruct((b_pad, h_pad), jnp.float32),
            jax.ShapeDtypeStruct((b_pad, h_pad), jnp.float32),
        ),
        grid_spec=pltpu.PrefetchScalarGridSpec(
            num_scalar_prefetch=0,
            grid=grid,
            in_specs=[
                pl.BlockSpec((tb, i_pad), lambda j, i: (i, 0)),      # x
                pl.BlockSpec((tb, h_pad), lambda j, i: (i, 0)),      # hx
                pl.BlockSpec((i_pad, 4 * th), lambda j, i: (0, j)),  # Wx (hidden only)
                pl.BlockSpec((h_pad, 4 * th), lambda j, i: (0, j)),  # Wh (hidden only)
                pl.BlockSpec((1, 4 * th), lambda j, i: (0, j)),      # bias
                pl.BlockSpec((tb, th), lambda j, i: (i, j)),         # c
            ],
            out_specs=[
                pl.BlockSpec((tb, th), lambda j, i: (i, j)),         # hy
                pl.BlockSpec((tb, th), lambda j, i: (i, j)),         # cy
            ],
        ),
        compiler_params=pltpu.CompilerParams(
            dimension_semantics=("parallel", "parallel"),
            vmem_limit_bytes=int(vmem_limit),
        ),
    )(x_p, hx_p, params.wx, params.wh, params.b, cx_p)

    return hy_p[:B, :H], cy_p[:B, :H]


# ---------------------------------------------------------------------------
# Reference + init (matches PyTorch module semantics)
# ---------------------------------------------------------------------------
def init_params(key, input_size, hidden_size):
    # PyTorch reset_parameters(): every param ~ U(-std, std), std = 1/sqrt(H)
    std = 1.0 / jnp.sqrt(jnp.float32(hidden_size))
    k1, k2, k3, k4 = jax.random.split(key, 4)
    wx = jax.random.uniform(k1, (4 * hidden_size, input_size), jnp.float32, -std, std)
    bx = jax.random.uniform(k2, (4 * hidden_size,), jnp.float32, -std, std)
    wh = jax.random.uniform(k3, (4 * hidden_size, hidden_size), jnp.float32, -std, std)
    bh = jax.random.uniform(k4, (4 * hidden_size,), jnp.float32, -std, std)
    return wx, bx, wh, bh


def lstm_cell_ref(x, hx, cx, wx, wh, bx, bh):
    H = hx.shape[1]
    gates = x @ wx.T + bx + hx @ wh.T + bh
    i, f, g, o = (gates[:, k * H:(k + 1) * H] for k in range(4))
    i, f, g, o = jax.nn.sigmoid(i), jax.nn.sigmoid(f), jnp.tanh(g), jax.nn.sigmoid(o)
    cy = cx * f + i * g
    hy = o * jnp.tanh(cy)
    return hy, cy


if __name__ == "__main__":
    input_size, hidden_size, batch = 16, 32, 8

    key = jax.random.PRNGKey(0)
    kp, kx, kh, kc = jax.random.split(key, 4)
    wx, bx, wh, bh = init_params(kp, input_size, hidden_size)

    x = jax.random.normal(kx, (batch, input_size), jnp.float32)
    hx = jax.random.normal(kh, (batch, hidden_size), jnp.float32)
    cx = jax.random.normal(kc, (batch, hidden_size), jnp.float32)

    hy_ref, cy_ref = lstm_cell_ref(x, hx, cx, wx, wh, bx, bh)

    # --- f32 weight path (tight tolerance vs reference) ---
    p_f32 = prepare_params(wx, wh, bx, bh, compute_dtype=jnp.float32)
    hy, cy = lstm_cell(x, hx, cx, p_f32)
    jax.block_until_ready((hy, cy))
    assert jnp.allclose(hy, hy_ref, atol=1e-5, rtol=1e-5)
    assert jnp.allclose(cy, cy_ref, atol=1e-5, rtol=1e-5)

    # --- bf16 weight path (default; halves weight HBM bytes; looser tol) ---
    p_bf16 = prepare_params(wx, wh, bx, bh)  # compute_dtype defaults to bf16
    hy_b, cy_b = lstm_cell(x, hx, cx, p_bf16)
    jax.block_until_ready((hy_b, cy_b))
    assert jnp.allclose(hy_b, hy_ref, atol=2e-2, rtol=2e-2)
    assert jnp.allclose(cy_b, cy_ref, atol=2e-2, rtol=2e-2)

    # --- hx=None default path (zero initial state), as in the module ---
    zeros = jnp.zeros((batch, hidden_size), jnp.float32)
    hy0, cy0 = lstm_cell(x, zeros, zeros, p_f32)
    jax.block_until_ready((hy0, cy0))
    hy0_ref, cy0_ref = lstm_cell_ref(x, zeros, zeros, wx, wh, bx, bh)
    assert jnp.allclose(hy0, hy0_ref, atol=1e-5, rtol=1e-5)
    assert jnp.allclose(cy0, cy0_ref, atol=1e-5, rtol=1e-5)

    print("KERNEL_OK")
</pallas_src>

<mosaic_0001>
module attributes {stable_mosaic.version = 11 : i64} {
  func.func @lstm_cell_kernel(%arg0: i32, %arg1: i32, %arg2: memref<8x128xf32, #tpu.memory_space<vmem>>, %arg3: memref<8x128xf32, #tpu.memory_space<vmem>>, %arg4: memref<128x512xf32, #tpu.memory_space<vmem>>, %arg5: memref<128x512xf32, #tpu.memory_space<vmem>>, %arg6: memref<1x512xf32, #tpu.memory_space<vmem>>, %arg7: memref<8x128xf32, #tpu.memory_space<vmem>>, %arg8: memref<8x128xf32, #tpu.memory_space<vmem>>, %arg9: memref<8x128xf32, #tpu.memory_space<vmem>>) attributes {dimension_semantics = [#tpu.dimension_semantics<parallel>, #tpu.dimension_semantics<parallel>], iteration_bounds = array<i64: 1, 1>, scalar_prefetch = 0 : i64, scratch_operands = 0 : i64, tpu.core_type = #tpu.core_type<tc>, window_params = [{transform_indices = @transform_0, window_bounds = array<i64: 8, 128>}, {transform_indices = @transform_1, window_bounds = array<i64: 8, 128>}, {transform_indices = @transform_2, window_bounds = array<i64: 128, 512>}, {transform_indices = @transform_3, window_bounds = array<i64: 128, 512>}, {transform_indices = @transform_4, window_bounds = array<i64: 1, 512>}, {transform_indices = @transform_5, window_bounds = array<i64: 8, 128>}, {transform_indices = @transform_6, window_bounds = array<i64: 8, 128>}, {transform_indices = @transform_7, window_bounds = array<i64: 8, 128>}]} {
    %c0 = arith.constant 0 : index
    %c0_0 = arith.constant 0 : index
    %0 = vector.load %arg2[%c0, %c0_0] : memref<8x128xf32, #tpu.memory_space<vmem>>, vector<8x128xf32>
    %c0_1 = arith.constant 0 : index
    %c0_2 = arith.constant 0 : index
    %1 = vector.load %arg3[%c0_1, %c0_2] : memref<8x128xf32, #tpu.memory_space<vmem>>, vector<8x128xf32>
    %c0_3 = arith.constant 0 : index
    %c0_4 = arith.constant 0 : index
    %2 = vector.load %arg4[%c0_3, %c0_4] : memref<128x512xf32, #tpu.memory_space<vmem>>, vector<128x512xf32>
    %cst = arith.constant dense<0.000000e+00> : vector<8x512xf32>
    %3 = tpu.matmul %0, %2, %cst {dimension_numbers = #tpu.dot_dimension_numbers<[1], [0], [0], [1], [0, 0, 1, 1], [], []>} : vector<8x128xf32>, vector<128x512xf32>, vector<8x512xf32> -> vector<8x512xf32>
    %c0_5 = arith.constant 0 : index
    %c0_6 = arith.constant 0 : index
    %4 = vector.load %arg5[%c0_5, %c0_6] : memref<128x512xf32, #tpu.memory_space<vmem>>, vector<128x512xf32>
    %cst_7 = arith.constant dense<0.000000e+00> : vector<8x512xf32>
    %5 = tpu.matmul %1, %4, %cst_7 {dimension_numbers = #tpu.dot_dimension_numbers<[1], [0], [0], [1], [0, 0, 1, 1], [], []>} : vector<8x128xf32>, vector<128x512xf32>, vector<8x512xf32> -> vector<8x512xf32>
    %6 = arith.addf %3, %5 : vector<8x512xf32>
    %c0_8 = arith.constant 0 : index
    %c0_9 = arith.constant 0 : index
    %7 = vector.load %arg6[%c0_8, %c0_9] : memref<1x512xf32, #tpu.memory_space<vmem>>, vector<1x512xf32>
    %8 = vector.broadcast %7 : vector<1x512xf32> to vector<8x512xf32>
    %9 = arith.addf %6, %8 : vector<8x512xf32>
    %10 = vector.extract_strided_slice %9 {offsets = [0, 0], sizes = [8, 128], strides = [1, 1]} : vector<8x512xf32> to vector<8x128xf32>
    %cst_10 = arith.constant 5.000000e-01 : f32
    %11 = vector.broadcast %cst_10 : f32 to vector<8x128xf32>
    %12 = arith.mulf %11, %10 : vector<8x128xf32>
    %13 = math.tanh %12 : vector<8x128xf32>
    %cst_11 = arith.constant 5.000000e-01 : f32
    %14 = vector.broadcast %cst_11 : f32 to vector<8x128xf32>
    %15 = arith.mulf %14, %13 : vector<8x128xf32>
    %cst_12 = arith.constant 5.000000e-01 : f32
    %16 = vector.broadcast %cst_12 : f32 to vector<8x128xf32>
    %17 = arith.addf %15, %16 : vector<8x128xf32>
    %18 = vector.extract_strided_slice %9 {offsets = [0, 128], sizes = [8, 128], strides = [1, 1]} : vector<8x512xf32> to vector<8x128xf32>
    %cst_13 = arith.constant 5.000000e-01 : f32
    %19 = vector.broadcast %cst_13 : f32 to vector<8x128xf32>
    %20 = arith.mulf %19, %18 : vector<8x128xf32>
    %21 = math.tanh %20 : vector<8x128xf32>
    %cst_14 = arith.constant 5.000000e-01 : f32
    %22 = vector.broadcast %cst_14 : f32 to vector<8x128xf32>
    %23 = arith.mulf %22, %21 : vector<8x128xf32>
    %cst_15 = arith.constant 5.000000e-01 : f32
    %24 = vector.broadcast %cst_15 : f32 to vector<8x128xf32>
    %25 = arith.addf %23, %24 : vector<8x128xf32>
    %26 = vector.extract_strided_slice %9 {offsets = [0, 256], sizes = [8, 128], strides = [1, 1]} : vector<8x512xf32> to vector<8x128xf32>
    %27 = math.tanh %26 : vector<8x128xf32>
    %28 = vector.extract_strided_slice %9 {offsets = [0, 384], sizes = [8, 128], strides = [1, 1]} : vector<8x512xf32> to vector<8x128xf32>
    %cst_16 = arith.constant 5.000000e-01 : f32
    %29 = vector.broadcast %cst_16 : f32 to vector<8x128xf32>
    %30 = arith.mulf %29, %28 : vector<8x128xf32>
    %31 = math.tanh %30 : vector<8x128xf32>
    %cst_17 = arith.constant 5.000000e-01 : f32
    %32 = vector.broadcast %cst_17 : f32 to vector<8x128xf32>
    %33 = arith.mulf %32, %31 : vector<8x128xf32>
    %cst_18 = arith.constant 5.000000e-01 : f32
    %34 = vector.broadcast %cst_18 : f32 to vector<8x128xf32>
    %35 = arith.addf %33, %34 : vector<8x128xf32>
    %c0_19 = arith.constant 0 : index
    %c0_20 = arith.constant 0 : index
    %36 = vector.load %arg7[%c0_19, %c0_20] : memref<8x128xf32, #tpu.memory_space<vmem>>, vector<8x128xf32>
    %37 = arith.mulf %36, %25 : vector<8x128xf32>
    %38 = arith.mulf %17, %27 : vector<8x128xf32>
    %39 = arith.addf %37, %38 : vector<8x128xf32>
    %40 = math.tanh %39 : vector<8x128xf32>
    %41 = arith.mulf %35, %40 : vector<8x128xf32>
    %c0_21 = arith.constant 0 : index
    %c0_22 = arith.constant 0 : index
    %42 = vector.load %arg9[%c0_21, %c0_22] : memref<8x128xf32, #tpu.memory_space<vmem>>, vector<8x128xf32>
    tpu.vector_store %arg9[%c0_21, %c0_22], %39 {strides = array<i32>} : memref<8x128xf32, #tpu.memory_space<vmem>>, vector<8x128xf32>,
    %c0_23 = arith.constant 0 : index
    %c0_24 = arith.constant 0 : index
    %43 = vector.load %arg8[%c0_23, %c0_24] : memref<8x128xf32, #tpu.memory_space<vmem>>, vector<8x128xf32>
    tpu.vector_store %arg8[%c0_23, %c0_24], %41 {strides = array<i32>} : memref<8x128xf32, #tpu.memory_space<vmem>>, vector<8x128xf32>,
    return
  }
  func.func @transform_0(%arg0: i32, %arg1: i32) -> (i32, i32) {
    %c0_i32 = arith.constant 0 : i32
    %c0_i32_0 = arith.constant 0 : i32
    return %arg1, %c0_i32 : i32, i32
  }
  func.func @transform_1(%arg0: i32, %arg1: i32) -> (i32, i32) {
    %c0_i32 = arith.constant 0 : i32
    %c0_i32_0 = arith.constant 0 : i32
    return %arg1, %c0_i32 : i32, i32
  }
  func.func @transform_2(%arg0: i32, %arg1: i32) -> (i32, i32) {
    %c0_i32 = arith.constant 0 : i32
    %c0_i32_0 = arith.constant 0 : i32
    return %c0_i32, %arg0 : i32, i32
  }
  func.func @transform_3(%arg0: i32, %arg1: i32) -> (i32, i32) {
    %c0_i32 = arith.constant 0 : i32
    %c0_i32_0 = arith.constant 0 : i32
    return %c0_i32, %arg0 : i32, i32
  }
  func.func @transform_4(%arg0: i32, %arg1: i32) -> (i32, i32) {
    %c0_i32 = arith.constant 0 : i32
    %c0_i32_0 = arith.constant 0 : i32
    return %c0_i32, %arg0 : i32, i32
  }
  func.func @transform_5(%arg0: i32, %arg1: i32) -> (i32, i32) {
    %c0_i32 = arith.constant 0 : i32
    return %arg1, %arg0 : i32, i32
  }
  func.func @transform_6(%arg0: i32, %arg1: i32) -> (i32, i32) {
    %c0_i32 = arith.constant 0 : i32
    return %arg1, %arg0 : i32, i32
  }
  func.func @transform_7(%arg0: i32, %arg1: i32) -> (i32, i32) {
    %c0_i32 = arith.constant 0 : i32
    return %arg1, %arg0 : i32, i32
  }
}

</mosaic_0001>

<llo_original>
// kernel: tpu_custom_call.1
$region0: #{tpu_custom_call.1}
  #allocation0 [shape = 'u32[]', space=smem, size = 0x4, offset = 0x4, fixed_abs, tag = 'smem constant byte address 0x4 - core index']
  #allocation1 [shape = 'u32[144,128]{1,0:T(1,128)}', space=vmem, size = 0x12000, scoped, tag = 'internal scratch']
  %s0 = inlined_call_operand.hbm [shape: f32[8,128], index: 0, kind: input, shape index: {}]
  %s1 = inlined_call_operand.hbm [shape: f32[8,128], index: 1, kind: input, shape index: {}]
  %s2 = inlined_call_operand.hbm [shape: f32[128,512], index: 2, kind: input, shape index: {}]
  %s3 = inlined_call_operand.hbm [shape: f32[128,512], index: 3, kind: input, shape index: {}]
  %s4 = inlined_call_operand.hbm [shape: f32[1,512], index: 4, kind: input, shape index: {}]
  %s5 = inlined_call_operand.vmem [shape: f32[8,128], index: 5, kind: input, shape index: {}]
  %s6 = inlined_call_operand.hbm [shape: f32[8,128], index: 6, kind: output, shape index: {0}]
  %s7 = inlined_call_operand.hbm [shape: f32[8,128], index: 7, kind: output, shape index: {1}]
  %8 = xla_tuple %s6, %s7
  %s9 = sld [smem:[#allocation0]]
  $region62: #{tpu_custom_call.1} parent=0
    _
  %s11 = ssub.s32 1, %s9
  %s12 = scalar_select 0, %s11, %s9
  $region1: #{tpu_custom_call.1} parent=0
    #allocation2 [shape = 'u8[4096]{0}', space=vmem, size = 0x1000, scoped, tag = 'input window, operand 0, single buffered']
    #allocation3 [shape = 's32[1]{0}', space=sflag, size = 0x4, scoped, tag = 'scoped memory for tpu_custom_call.1']
    #allocation4 [shape = 's32[1]{0}', space=sflag, size = 0x4, scoped, tag = 'scoped memory for tpu_custom_call.1']
    #allocation5 [shape = 'u8[4096]{0}', space=vmem, size = 0x1000, scoped, tag = 'input window, operand 1, single buffered']
    #allocation6 [shape = 's32[1]{0}', space=sflag, size = 0x4, scoped, tag = 'scoped memory for tpu_custom_call.1']
    #allocation7 [shape = 'u8[262144]{0}', space=vmem, size = 0x40000, scoped, tag = 'input window, operand 2, single buffered']
    #allocation8 [shape = 'u8[262144]{0}', space=vmem, size = 0x40000, scoped, tag = 'input window, operand 3, single buffered']
    #allocation9 [shape = 's32[1]{0}', space=sflag, size = 0x4, scoped, tag = 'scoped memory for tpu_custom_call.1']
    #allocation10 [shape = 'u8[2048]{0}', space=vmem, size = 0x800, scoped, tag = 'input window, operand 4, single buffered']
    #allocation11 [shape = 'u8[4096]{0}', space=vmem, size = 0x1000, scoped, tag = 'output window, operand 0, single buffered']
    #allocation12 [shape = 'u8[4096]{0}', space=vmem, size = 0x1000, scoped, tag = 'output window, operand 1, single buffered']
    #allocation13 [shape = 's32[1]{0}', space=sflag, size = 0x4, scoped, tag = 'scoped memory for tpu_custom_call.1']
    %13 = vsyncpa [#allocation3], 0
    %14 = vsyncpa [#allocation6], 0
    %15 = vsyncpa [#allocation9], 0
    %16 = vsyncpa [#allocation4], 0
    %17 = vsyncpa [#allocation13], 0
    // Predicated region
    $region2: #{tpu_custom_call.1} parent=1 // pred_check
      _
    $region3: #{tpu_custom_call.1} parent=1 // pred_check_branch
      %19 = sbr.rel (0) target = $region5
    $region4: #{tpu_custom_call.1} parent=1 // pred_region
      %s21 = ssub.s32 128, 128
      %22 = vsyncadd [#allocation3], %s21
      %s24 = sshll.u32 [#allocation2], 4
      %s25 = int_to_ptr.vmem [resolvable:$true] %s24
      %27 = dma.hbm_to_vmem [thread:$0]  %s0, 128, %s25, [#allocation3]
    $region5: #{tpu_custom_call.1} parent=1 // pred_fallthru
      _
    // Predicated region
    $region6: #{tpu_custom_call.1} parent=1 // pred_check
      _
    $region7: #{tpu_custom_call.1} parent=1 // pred_check_branch
      %29 = sbr.rel (0) target = $region9
    $region8: #{tpu_custom_call.1} parent=1 // pred_region
      %s31 = ssub.s32 128, 128
      %32 = vsyncadd [#allocation6], %s31
      %s34 = sshll.u32 [#allocation5], 4
      %s35 = int_to_ptr.vmem [resolvable:$true] %s34
      %37 = dma.hbm_to_vmem [thread:$0]  %s1, 128, %s35, [#allocation6]
    $region9: #{tpu_custom_call.1} parent=1 // pred_fallthru
      _
    // Predicated region
    $region10: #{tpu_custom_call.1} parent=1 // pred_check
      _
    $region11: #{tpu_custom_call.1} parent=1 // pred_check_branch
      %39 = sbr.rel (0) target = $region13
    $region12: #{tpu_custom_call.1} parent=1 // pred_region
      %s41 = ssub.s32 8192, 8192
      %42 = vsyncadd [#allocation6], %s41
      %s43 = sshll.u32 [#allocation7], 4
      %s44 = int_to_ptr.vmem [resolvable:$true] %s43
      %49 = dma.hbm_to_vmem [thread:$0]  %s2, 8192, %s44, [#allocation6], 512, 512, 32
    $region13: #{tpu_custom_call.1} parent=1 // pred_fallthru
      _
    // Predicated region
    $region14: #{tpu_custom_call.1} parent=1 // pred_check
      _
    $region15: #{tpu_custom_call.1} parent=1 // pred_check_branch
      %51 = sbr.rel (0) target = $region17
    $region16: #{tpu_custom_call.1} parent=1 // pred_region
      %s53 = ssub.s32 8192, 8192
      %54 = vsyncadd [#allocation9], %s53
      %s55 = sshll.u32 [#allocation8], 4
      %s56 = int_to_ptr.vmem [resolvable:$true] %s55
      %61 = dma.hbm_to_vmem [thread:$0]  %s3, 8192, %s56, [#allocation9], 512, 512, 32
    $region17: #{tpu_custom_call.1} parent=1 // pred_fallthru
      _
    // Predicated region
    $region18: #{tpu_custom_call.1} parent=1 // pred_check
      _
    $region19: #{tpu_custom_call.1} parent=1 // pred_check_branch
      %63 = sbr.rel (0) target = $region21
    $region20: #{tpu_custom_call.1} parent=1 // pred_region
      %s65 = ssub.s32 64, 64
      %66 = vsyncadd [#allocation9], %s65
      %s68 = sshll.u32 [#allocation10], 4
      %s69 = int_to_ptr.vmem [resolvable:$true] %s68
      %71 = dma.hbm_to_vmem [thread:$0]  %s4, 64, %s69, [#allocation9]
    $region21: #{tpu_custom_call.1} parent=1 // pred_fallthru
      _
    // Predicated region
    $region22: #{tpu_custom_call.1} parent=1 // pred_check
      _
    $region23: #{tpu_custom_call.1} parent=1 // pred_check_branch
      %73 = sbr.rel (0) target = $region25
    $region24: #{tpu_custom_call.1} parent=1 // pred_region
      _
    $region25: #{tpu_custom_call.1} parent=1 // pred_fallthru
      _
    // Predicated region
    $region26: #{tpu_custom_call.1} parent=1 // pred_check
      _
    $region27: #{tpu_custom_call.1} parent=1 // pred_check_branch
      %75 = sbr.rel (0) target = $region29
    $region28: #{tpu_custom_call.1} parent=1 // pred_region
      %76 = dma.done [#allocation3], 128
    $region29: #{tpu_custom_call.1} parent=1 // pred_fallthru
      _
    // Predicated region
    $region30: #{tpu_custom_call.1} parent=1 // pred_check
      _
    $region31: #{tpu_custom_call.1} parent=1 // pred_check_branch
      %78 = sbr.rel (0) target = $region33
    $region32: #{tpu_custom_call.1} parent=1 // pred_region
      %79 = dma.done [#allocation6], 128
    $region33: #{tpu_custom_call.1} parent=1 // pred_fallthru
      _
    // Predicated region
    $region34: #{tpu_custom_call.1} parent=1 // pred_check
      _
    $region35: #{tpu_custom_call.1} parent=1 // pred_check_branch
      %81 = sbr.rel (0) target = $region37
    $region36: #{tpu_custom_call.1} parent=1 // pred_region
      %82 = dma.done [#allocation6], 8192
    $region37: #{tpu_custom_call.1} parent=1 // pred_fallthru
      _
    // Predicated region
    $region38: #{tpu_custom_call.1} parent=1 // pred_check
      _
    $region39: #{tpu_custom_call.1} parent=1 // pred_check_branch
      %84 = sbr.rel (0) target = $region41
    $region40: #{tpu_custom_call.1} parent=1 // pred_region
      %85 = dma.done [#allocation9], 8192
    $region41: #{tpu_custom_call.1} parent=1 // pred_fallthru
      _
    // Predicated region
    $region42: #{tpu_custom_call.1} parent=1 // pred_check
      _
    $region43: #{tpu_custom_call.1} parent=1 // pred_check_branch
      %87 = sbr.rel (0) target = $region45
    $region44: #{tpu_custom_call.1} parent=1 // pred_region
      %88 = dma.done [#allocation9], 64
    $region45: #{tpu_custom_call.1} parent=1 // pred_fallthru
      _
    %v89 = vld [vmem:[#allocation2] sm:$0xff]
    %v90 = vld [vmem:[#allocation5] sm:$0xff]
    %v91 = vld [vmem:[#allocation7] sm:$0xff]
    %v92 = vld [vmem:[#allocation7 + $0x8] sm:$0xff]
    %v93 = vld [vmem:[#allocation7 + $0x10] sm:$0xff]
    %v94 = vld [vmem:[#allocation7 + $0x18] sm:$0xff]
    %v95 = vld [vmem:[#allocation7 + $0x20] sm:$0xff]
    %v96 = vld [vmem:[#allocation7 + $0x28] sm:$0xff]
    %v97 = vld [vmem:[#allocation7 + $0x30] sm:$0xff]
    %v98 = vld [vmem:[#allocation7 + $0x38] sm:$0xff]
    %v99 = vld [vmem:[#allocation7 + $0x40] sm:$0xff]
    %v100 = vld [vmem:[#allocation7 + $0x48] sm:$0xff]
    %v101 = vld [vmem:[#allocation7 + $0x50] sm:$0xff]
    %v102 = vld [vmem:[#allocation7 + $0x58] sm:$0xff]
    %v103 = vld [vmem:[#allocation7 + $0x60] sm:$0xff]
    %v104 = vld [vmem:[#allocation7 + $0x68] sm:$0xff]
    %v105 = vld [vmem:[#allocation7 + $0x70] sm:$0xff]
    %v106 = vld [vmem:[#allocation7 + $0x78] sm:$0xff]
    %v107 = vld [vmem:[#allocation7 + $0x80] sm:$0xff]
    %v108 = vld [vmem:[#allocation7 + $0x88] sm:$0xff]
    %v109 = vld [vmem:[#allocation7 + $0x90] sm:$0xff]
    %v110 = vld [vmem:[#allocation7 + $0x98] sm:$0xff]
    %v111 = vld [vmem:[#allocation7 + $0xa0] sm:$0xff]
    %v112 = vld [vmem:[#allocation7 + $0xa8] sm:$0xff]
    %v113 = vld [vmem:[#allocation7 + $0xb0] sm:$0xff]
    %v114 = vld [vmem:[#allocation7 + $0xb8] sm:$0xff]
    %v115 = vld [vmem:[#allocation7 + $0xc0] sm:$0xff]
    %v116 = vld [vmem:[#allocation7 + $0xc8] sm:$0xff]
    %v117 = vld [vmem:[#allocation7 + $0xd0] sm:$0xff]
    %v118 = vld [vmem:[#allocation7 + $0xd8] sm:$0xff]
    %v119 = vld [vmem:[#allocation7 + $0xe0] sm:$0xff]
    %v120 = vld [vmem:[#allocation7 + $0xe8] sm:$0xff]
    %v121 = vld [vmem:[#allocation7 + $0xf0] sm:$0xff]
    %v122 = vld [vmem:[#allocation7 + $0xf8] sm:$0xff]
    %v123 = vld [vmem:[#allocation7 + $0x100] sm:$0xff]
    %v124 = vld [vmem:[#allocation7 + $0x108] sm:$0xff]
    %v125 = vld [vmem:[#allocation7 + $0x110] sm:$0xff]
    %v126 = vld [vmem:[#allocation7 + $0x118] sm:$0xff]
    %v127 = vld [vmem:[#allocation7 + $0x120] sm:$0xff]
    %v128 = vld [vmem:[#allocation7 + $0x128] sm:$0xff]
    %v129 = vld [vmem:[#allocation7 + $0x130] sm:$0xff]
    %v130 = vld [vmem:[#allocation7 + $0x138] sm:$0xff]
    %v131 = vld [vmem:[#allocation7 + $0x140] sm:$0xff]
    %v132 = vld [vmem:[#allocation7 + $0x148] sm:$0xff]
    %v133 = vld [vmem:[#allocation7 + $0x150] sm:$0xff]
    %v134 = vld [vmem:[#allocation7 + $0x158] sm:$0xff]
    %v135 = vld [vmem:[#allocation7 + $0x160] sm:$0xff]
    %v136 = vld [vmem:[#allocation7 + $0x168] sm:$0xff]
    %v137 = vld [vmem:[#allocation7 + $0x170] sm:$0xff]
    %v138 = vld [vmem:[#allocation7 + $0x178] sm:$0xff]
    %v139 = vld [vmem:[#allocation7 + $0x180] sm:$0xff]
    %v140 = vld [vmem:[#allocation7 + $0x188] sm:$0xff]
    %v141 = vld [vmem:[#allocation7 + $0x190] sm:$0xff]
    %v142 = vld [vmem:[#allocation7 + $0x198] sm:$0xff]
    %v143 = vld [vmem:[#allocation7 + $0x1a0] sm:$0xff]
    %v144 = vld [vmem:[#allocation7 + $0x1a8] sm:$0xff]
    %v145 = vld [vmem:[#allocation7 + $0x1b0] sm:$0xff]
    %v146 = vld [vmem:[#allocation7 + $0x1b8] sm:$0xff]
    %v147 = vld [vmem:[#allocation7 + $0x1c0] sm:$0xff]
    %v148 = vld [vmem:[#allocation7 + $0x1c8] sm:$0xff]
    %v149 = vld [vmem:[#allocation7 + $0x1d0] sm:$0xff]
    %v150 = vld [vmem:[#allocation7 + $0x1d8] sm:$0xff]
    %v151 = vld [vmem:[#allocation7 + $0x1e0] sm:$0xff]
    %v152 = vld [vmem:[#allocation7 + $0x1e8] sm:$0xff]
    %v153 = vld [vmem:[#allocation7 + $0x1f0] sm:$0xff]
    %v154 = vld [vmem:[#allocation7 + $0x1f8] sm:$0xff]
    %v155 = vld [vmem:[#allocation8] sm:$0xff]
    %v156 = vld [vmem:[#allocation8 + $0x8] sm:$0xff]
    %v157 = vld [vmem:[#allocation8 + $0x10] sm:$0xff]
    %v158 = vld [vmem:[#allocation8 + $0x18] sm:$0xff]
    %v159 = vld [vmem:[#allocation8 + $0x20] sm:$0xff]
    %v160 = vld [vmem:[#allocation8 + $0x28] sm:$0xff]
    %v161 = vld [vmem:[#allocation8 + $0x30] sm:$0xff]
    %v162 = vld [vmem:[#allocation8 + $0x38] sm:$0xff]
    %v163 = vld [vmem:[#allocation8 + $0x40] sm:$0xff]
    %v164 = vld [vmem:[#allocation8 + $0x48] sm:$0xff]
    %v165 = vld [vmem:[#allocation8 + $0x50] sm:$0xff]
    %v166 = vld [vmem:[#allocation8 + $0x58] sm:$0xff]
    %v167 = vld [vmem:[#allocation8 + $0x60] sm:$0xff]
    %v168 = vld [vmem:[#allocation8 + $0x68] sm:$0xff]
    %v169 = vld [vmem:[#allocation8 + $0x70] sm:$0xff]
    %v170 = vld [vmem:[#allocation8 + $0x78] sm:$0xff]
    %v171 = vld [vmem:[#allocation8 + $0x80] sm:$0xff]
    %v172 = vld [vmem:[#allocation8 + $0x88] sm:$0xff]
    %v173 = vld [vmem:[#allocation8 + $0x90] sm:$0xff]
    %v174 = vld [vmem:[#allocation8 + $0x98] sm:$0xff]
    %v175 = vld [vmem:[#allocation8 + $0xa0] sm:$0xff]
    %v176 = vld [vmem:[#allocation8 + $0xa8] sm:$0xff]
    %v177 = vld [vmem:[#allocation8 + $0xb0] sm:$0xff]
    %v178 = vld [vmem:[#allocation8 + $0xb8] sm:$0xff]
    %v179 = vld [vmem:[#allocation8 + $0xc0] sm:$0xff]
    %v180 = vld [vmem:[#allocation8 + $0xc8] sm:$0xff]
    %v181 = vld [vmem:[#allocation8 + $0xd0] sm:$0xff]
    %v182 = vld [vmem:[#allocation8 + $0xd8] sm:$0xff]
    %v183 = vld [vmem:[#allocation8 + $0xe0] sm:$0xff]
    %v184 = vld [vmem:[#allocation8 + $0xe8] sm:$0xff]
    %v185 = vld [vmem:[#allocation8 + $0xf0] sm:$0xff]
    %v186 = vld [vmem:[#allocation8 + $0xf8] sm:$0xff]
    %v187 = vld [vmem:[#allocation8 + $0x100] sm:$0xff]
    %v188 = vld [vmem:[#allocation8 + $0x108] sm:$0xff]
    %v189 = vld [vmem:[#allocation8 + $0x110] sm:$0xff]
    %v190 = vld [vmem:[#allocation8 + $0x118] sm:$0xff]
    %v191 = vld [vmem:[#allocation8 + $0x120] sm:$0xff]
    %v192 = vld [vmem:[#allocation8 + $0x128] sm:$0xff]
    %v193 = vld [vmem:[#allocation8 + $0x130] sm:$0xff]
    %v194 = vld [vmem:[#allocation8 + $0x138] sm:$0xff]
    %v195 = vld [vmem:[#allocation8 + $0x140] sm:$0xff]
    %v196 = vld [vmem:[#allocation8 + $0x148] sm:$0xff]
    %v197 = vld [vmem:[#allocation8 + $0x150] sm:$0xff]
    %v198 = vld [vmem:[#allocation8 + $0x158] sm:$0xff]
    %v199 = vld [vmem:[#allocation8 + $0x160] sm:$0xff]
    %v200 = vld [vmem:[#allocation8 + $0x168] sm:$0xff]
    %v201 = vld [vmem:[#allocation8 + $0x170] sm:$0xff]
    %v202 = vld [vmem:[#allocation8 + $0x178] sm:$0xff]
    %v203 = vld [vmem:[#allocation8 + $0x180] sm:$0xff]
    %v204 = vld [vmem:[#allocation8 + $0x188] sm:$0xff]
    %v205 = vld [vmem:[#allocation8 + $0x190] sm:$0xff]
    %v206 = vld [vmem:[#allocation8 + $0x198] sm:$0xff]
    %v207 = vld [vmem:[#allocation8 + $0x1a0] sm:$0xff]
    %v208 = vld [vmem:[#allocation8 + $0x1a8] sm:$0xff]
    %v209 = vld [vmem:[#allocation8 + $0x1b0] sm:$0xff]
    %v210 = vld [vmem:[#allocation8 + $0x1b8] sm:$0xff]
    %v211 = vld [vmem:[#allocation8 + $0x1c0] sm:$0xff]
    %v212 = vld [vmem:[#allocation8 + $0x1c8] sm:$0xff]
    %v213 = vld [vmem:[#allocation8 + $0x1d0] sm:$0xff]
    %v214 = vld [vmem:[#allocation8 + $0x1d8] sm:$0xff]
    %v215 = vld [vmem:[#allocation8 + $0x1e0] sm:$0xff]
    %v216 = vld [vmem:[#allocation8 + $0x1e8] sm:$0xff]
    %v217 = vld [vmem:[#allocation8 + $0x1f0] sm:$0xff]
    %v218 = vld [vmem:[#allocation8 + $0x1f8] sm:$0xff]
    %219 = vmatprep.subr.mxu0 %v216
    %220 = vmatpush1.msra.mxu0 %v215
    %221 = vmatprep.subr.mxu0 %v212
    %222 = vmatpush1.msra.mxu0 %v211
    %223 = vmatprep.subr.mxu0 %v208
    %224 = vmatpush1.msra.mxu0 %v207
    %225 = vmatprep.subr.mxu0 %v204
    %226 = vmatpush1.msra.mxu0 %v203
    %227 = vmatprep.subr.mxu0 %v200
    %228 = vmatpush1.msra.mxu0 %v199
    %229 = vmatprep.subr.mxu0 %v196
    %230 = vmatpush1.msra.mxu0 %v195
    %231 = vmatprep.subr.mxu0 %v192
    %232 = vmatpush1.msra.mxu0 %v191
    %233 = vmatprep.subr.mxu0 %v188
    %234 = vmatpush1.msra.mxu0 %v187
    %235 = vmatprep.subr.mxu0 %v184
    %236 = vmatpush1.msra.mxu0 %v183
    %237 = vmatprep.subr.mxu0 %v180
    %238 = vmatpush1.msra.mxu0 %v179
    %239 = vmatprep.subr.mxu0 %v176
    %240 = vmatpush1.msra.mxu0 %v175
    %241 = vmatprep.subr.mxu0 %v172
    %242 = vmatpush1.msra.mxu0 %v171
    %243 = vmatprep.subr.mxu0 %v168
    %244 = vmatpush1.msra.mxu0 %v167
    %245 = vmatprep.subr.mxu0 %v164
    %246 = vmatpush1.msra.mxu0 %v163
    %247 = vmatprep.subr.mxu0 %v160
    %248 = vmatpush1.msra.mxu0 %v159
    %249 = vmatprep.subr.mxu0 %v156
    %250 = vmatpush1.msra.mxu0 %v155
    %251 = vmatprep.subr.mxu0 0.0
    %252 = vmatpush2.msra.mxu0 0.0
    %253 = vmatprep.subr.mxu0 0.0
    %254 = vmatpush2.msra.mxu0 0.0
    %255 = vmatprep.subr.mxu0 0.0
    %256 = vmatpush2.msra.mxu0 0.0
    %257 = vmatprep.subr.mxu0 0.0
    %258 = vmatpush2.msra.mxu0 0.0
    %259 = vmatprep.subr.mxu0 0.0
    %260 = vmatpush2.msra.mxu0 0.0
    %261 = vmatprep.subr.mxu0 0.0
    %262 = vmatpush2.msra.mxu0 0.0
    %263 = vmatprep.subr.mxu0 0.0
    %264 = vmatpush2.msra.mxu0 0.0
    %265 = vmatprep.subr.mxu0 0.0
    %266 = vmatpush2.msra.mxu0 0.0
    %267 = vmatprep.subr.mxu0 0.0
    %268 = vmatpush2.msra.mxu0 0.0
    %269 = vmatprep.subr.mxu0 0.0
    %270 = vmatpush2.msra.mxu0 0.0
    %271 = vmatprep.subr.mxu0 0.0
    %272 = vmatpush2.msra.mxu0 0.0
    %273 = vmatprep.subr.mxu0 0.0
    %274 = vmatpush2.msra.mxu0 0.0
    %275 = vmatprep.subr.mxu0 0.0
    %276 = vmatpush2.msra.mxu0 0.0
    %277 = vmatprep.subr.mxu0 0.0
    %278 = vmatpush2.msra.mxu0 0.0
    %279 = vmatprep.subr.mxu0 0.0
    %280 = vmatpush2.msra.mxu0 0.0
    %281 = vmatprep.subr.mxu0 0.0
    %282 = vmatpush2.msra.mxu0 0.0
    %283 = vmatprep.mubr.f32.mxu0 0.0
    %284 = vmatmul.mubr.f32.gmra.mxu0 %v90
    %v285 = vpop.f32.mrf.mxu0
    %v286 = vadd.f32 0.0, %v285
    %v287 = vpop.f32.mrf.mxu0
    %v288 = vadd.f32 0.0, %v287
    %289 = vdwg.mxu0
    %290 = vmatprep.subr.mxu0 %v218
    %291 = vmatpush1.msra.mxu0 %v217
    %292 = vmatprep.subr.mxu0 %v214
    %293 = vmatpush1.msra.mxu0 %v213
    %294 = vmatprep.subr.mxu0 %v210
    %295 = vmatpush1.msra.mxu0 %v209
    %296 = vmatprep.subr.mxu0 %v206
    %297 = vmatpush1.msra.mxu0 %v205
    %298 = vmatprep.subr.mxu0 %v202
    %299 = vmatpush1.msra.mxu0 %v201
    %300 = vmatprep.subr.mxu0 %v198
    %301 = vmatpush1.msra.mxu0 %v197
    %302 = vmatprep.subr.mxu0 %v194
    %303 = vmatpush1.msra.mxu0 %v193
    %304 = vmatprep.subr.mxu0 %v190
    %305 = vmatpush1.msra.mxu0 %v189
    %306 = vmatprep.subr.mxu0 %v186
    %307 = vmatpush1.msra.mxu0 %v185
    %308 = vmatprep.subr.mxu0 %v182
    %309 = vmatpush1.msra.mxu0 %v181
    %310 = vmatprep.subr.mxu0 %v178
    %311 = vmatpush1.msra.mxu0 %v177
    %312 = vmatprep.subr.mxu0 %v174
    %313 = vmatpush1.msra.mxu0 %v173
    %314 = vmatprep.subr.mxu0 %v170
    %315 = vmatpush1.msra.mxu0 %v169
    %316 = vmatprep.subr.mxu0 %v166
    %317 = vmatpush1.msra.mxu0 %v165
    %318 = vmatprep.subr.mxu0 %v162
    %319 = vmatpush1.msra.mxu0 %v161
    %320 = vmatprep.subr.mxu0 %v158
    %321 = vmatpush1.msra.mxu0 %v157
    %322 = vmatprep.subr.mxu0 0.0
    %323 = vmatpush2.msra.mxu0 0.0
    %324 = vmatprep.subr.mxu0 0.0
    %325 = vmatpush2.msra.mxu0 0.0
    %326 = vmatprep.subr.mxu0 0.0
    %327 = vmatpush2.msra.mxu0 0.0
    %328 = vmatprep.subr.mxu0 0.0
    %329 = vmatpush2.msra.mxu0 0.0
    %330 = vmatprep.subr.mxu0 0.0
    %331 = vmatpush2.msra.mxu0 0.0
    %332 = vmatprep.subr.mxu0 0.0
    %333 = vmatpush2.msra.mxu0 0.0
    %334 = vmatprep.subr.mxu0 0.0
    %335 = vmatpush2.msra.mxu0 0.0
    %336 = vmatprep.subr.mxu0 0.0
    %337 = vmatpush2.msra.mxu0 0.0
    %338 = vmatprep.subr.mxu0 0.0
    %339 = vmatpush2.msra.mxu0 0.0
    %340 = vmatprep.subr.mxu0 0.0
    %341 = vmatpush2.msra.mxu0 0.0
    %342 = vmatprep.subr.mxu0 0.0
    %343 = vmatpush2.msra.mxu0 0.0
    %344 = vmatprep.subr.mxu0 0.0
    %345 = vmatpush2.msra.mxu0 0.0
    %346 = vmatprep.subr.mxu0 0.0
    %347 = vmatpush2.msra.mxu0 0.0
    %348 = vmatprep.subr.mxu0 0.0
    %349 = vmatpush2.msra.mxu0 0.0
    %350 = vmatprep.subr.mxu0 0.0
    %351 = vmatpush2.msra.mxu0 0.0
    %352 = vmatprep.subr.mxu0 0.0
    %353 = vmatpush2.msra.mxu0 0.0
    %354 = vmatprep.mubr.f32.mxu0 0.0
    %355 = vmatmul.mubr.f32.gmra.mxu0 %v90
    %v356 = vpop.f32.mrf.mxu0
    %v357 = vadd.f32 0.0, %v356
    %v358 = vpop.f32.mrf.mxu0
    %v359 = vadd.f32 0.0, %v358
    %360 = vdwg.mxu0
    %361 = vmatprep.subr.mxu0 %v152
    %362 = vmatpush1.msra.mxu0 %v151
    %363 = vmatprep.subr.mxu0 %v148
    %364 = vmatpush1.msra.mxu0 %v147
    %365 = vmatprep.subr.mxu0 %v144
    %366 = vmatpush1.msra.mxu0 %v143
    %367 = vmatprep.subr.mxu0 %v140
    %368 = vmatpush1.msra.mxu0 %v139
    %369 = vmatprep.subr.mxu0 %v136
    %370 = vmatpush1.msra.mxu0 %v135
    %371 = vmatprep.subr.mxu0 %v132
    %372 = vmatpush1.msra.mxu0 %v131
    %373 = vmatprep.subr.mxu0 %v128
    %374 = vmatpush1.msra.mxu0 %v127
    %375 = vmatprep.subr.mxu0 %v124
    %376 = vmatpush1.msra.mxu0 %v123
    %377 = vmatprep.subr.mxu0 %v120
    %378 = vmatpush1.msra.mxu0 %v119
    %379 = vmatprep.subr.mxu0 %v116
    %380 = vmatpush1.msra.mxu0 %v115
    %381 = vmatprep.subr.mxu0 %v112
    %382 = vmatpush1.msra.mxu0 %v111
    %383 = vmatprep.subr.mxu0 %v108
    %384 = vmatpush1.msra.mxu0 %v107
    %385 = vmatprep.subr.mxu0 %v104
    %386 = vmatpush1.msra.mxu0 %v103
    %387 = vmatprep.subr.mxu0 %v100
    %388 = vmatpush1.msra.mxu0 %v99
    %389 = vmatprep.subr.mxu0 %v96
    %390 = vmatpush1.msra.mxu0 %v95
    %391 = vmatprep.subr.mxu0 %v92
    %392 = vmatpush1.msra.mxu0 %v91
    %393 = vmatprep.subr.mxu0 0.0
    %394 = vmatpush2.msra.mxu0 0.0
    %395 = vmatprep.subr.mxu0 0.0
    %396 = vmatpush2.msra.mxu0 0.0
    %397 = vmatprep.subr.mxu0 0.0
    %398 = vmatpush2.msra.mxu0 0.0
    %399 = vmatprep.subr.mxu0 0.0
    %400 = vmatpush2.msra.mxu0 0.0
    %401 = vmatprep.subr.mxu0 0.0
    %402 = vmatpush2.msra.mxu0 0.0
    %403 = vmatprep.subr.mxu0 0.0
    %404 = vmatpush2.msra.mxu0 0.0
    %405 = vmatprep.subr.mxu0 0.0
    %406 = vmatpush2.msra.mxu0 0.0
    %407 = vmatprep.subr.mxu0 0.0
    %408 = vmatpush2.msra.mxu0 0.0
    %409 = vmatprep.subr.mxu0 0.0
    %410 = vmatpush2.msra.mxu0 0.0
    %411 = vmatprep.subr.mxu0 0.0
    %412 = vmatpush2.msra.mxu0 0.0
    %413 = vmatprep.subr.mxu0 0.0
    %414 = vmatpush2.msra.mxu0 0.0
    %415 = vmatprep.subr.mxu0 0.0
    %416 = vmatpush2.msra.mxu0 0.0
    %417 = vmatprep.subr.mxu0 0.0
    %418 = vmatpush2.msra.mxu0 0.0
    %419 = vmatprep.subr.mxu0 0.0
    %420 = vmatpush2.msra.mxu0 0.0
    %421 = vmatprep.subr.mxu0 0.0
    %422 = vmatpush2.msra.mxu0 0.0
    %423 = vmatprep.subr.mxu0 0.0
    %424 = vmatpush2.msra.mxu0 0.0
    %425 = vmatprep.mubr.f32.mxu0 0.0
    %426 = vmatmul.mubr.f32.gmra.mxu0 %v89
    %v427 = vpop.f32.mrf.mxu0
    %v428 = vadd.f32 %v286, %v427
    %v429 = vpop.f32.mrf.mxu0
    %v430 = vadd.f32 %v288, %v429
    %431 = vdwg.mxu0
    %432 = vmatprep.subr.mxu0 %v154
    %433 = vmatpush1.msra.mxu0 %v153
    %434 = vmatprep.subr.mxu0 %v150
    %435 = vmatpush1.msra.mxu0 %v149
    %436 = vmatprep.subr.mxu0 %v146
    %437 = vmatpush1.msra.mxu0 %v145
    %438 = vmatprep.subr.mxu0 %v142
    %439 = vmatpush1.msra.mxu0 %v141
    %440 = vmatprep.subr.mxu0 %v138
    %441 = vmatpush1.msra.mxu0 %v137
    %442 = vmatprep.subr.mxu0 %v134
    %443 = vmatpush1.msra.mxu0 %v133
    %444 = vmatprep.subr.mxu0 %v130
    %445 = vmatpush1.msra.mxu0 %v129
    %446 = vmatprep.subr.mxu0 %v126
    %447 = vmatpush1.msra.mxu0 %v125
    %448 = vmatprep.subr.mxu0 %v122
    %449 = vmatpush1.msra.mxu0 %v121
    %450 = vmatprep.subr.mxu0 %v118
    %451 = vmatpush1.msra.mxu0 %v117
    %452 = vmatprep.subr.mxu0 %v114
    %453 = vmatpush1.msra.mxu0 %v113
    %454 = vmatprep.subr.mxu0 %v110
    %455 = vmatpush1.msra.mxu0 %v109
    %456 = vmatprep.subr.mxu0 %v106
    %457 = vmatpush1.msra.mxu0 %v105
    %458 = vmatprep.subr.mxu0 %v102
    %459 = vmatpush1.msra.mxu0 %v101
    %460 = vmatprep.subr.mxu0 %v98
    %461 = vmatpush1.msra.mxu0 %v97
    %462 = vmatprep.subr.mxu0 %v94
    %463 = vmatpush1.msra.mxu0 %v93
    %464 = vmatprep.subr.mxu0 0.0
    %465 = vmatpush2.msra.mxu0 0.0
    %466 = vmatprep.subr.mxu0 0.0
    %467 = vmatpush2.msra.mxu0 0.0
    %468 = vmatprep.subr.mxu0 0.0
    %469 = vmatpush2.msra.mxu0 0.0
    %470 = vmatprep.subr.mxu0 0.0
    %471 = vmatpush2.msra.mxu0 0.0
    %472 = vmatprep.subr.mxu0 0.0
    %473 = vmatpush2.msra.mxu0 0.0
    %474 = vmatprep.subr.mxu0 0.0
    %475 = vmatpush2.msra.mxu0 0.0
    %476 = vmatprep.subr.mxu0 0.0
    %477 = vmatpush2.msra.mxu0 0.0
    %478 = vmatprep.subr.mxu0 0.0
    %479 = vmatpush2.msra.mxu0 0.0
    %480 = vmatprep.subr.mxu0 0.0
    %481 = vmatpush2.msra.mxu0 0.0
    %482 = vmatprep.subr.mxu0 0.0
    %483 = vmatpush2.msra.mxu0 0.0
    %484 = vmatprep.subr.mxu0 0.0
    %485 = vmatpush2.msra.mxu0 0.0
    %486 = vmatprep.subr.mxu0 0.0
    %487 = vmatpush2.msra.mxu0 0.0
    %488 = vmatprep.subr.mxu0 0.0
    %489 = vmatpush2.msra.mxu0 0.0
    %490 = vmatprep.subr.mxu0 0.0
    %491 = vmatpush2.msra.mxu0 0.0
    %492 = vmatprep.subr.mxu0 0.0
    %493 = vmatpush2.msra.mxu0 0.0
    %494 = vmatprep.subr.mxu0 0.0
    %495 = vmatpush2.msra.mxu0 0.0
    %496 = vmatprep.mubr.f32.mxu0 0.0
    %497 = vmatmul.mubr.f32.gmra.mxu0 %v89
    %v498 = vpop.f32.mrf.mxu0
    %v499 = vadd.f32 %v357, %v498
    %v500 = vpop.f32.mrf.mxu0
    %v501 = vadd.f32 %v359, %v500
    %502 = vdwg.mxu0
    %v503 = vld [vmem:[#allocation10] sm:$0xf]
    %v505 = vlaneseq
    %v506 = vshrl.u32 %v505, 7
    %v507 = vsub.s32 0, %v506
    %v508 = vrot.slane %v503, %v507
    %v509 = vlaneseq
    %v510 = vshrl.u32 %v509, 7
    %v511 = vsub.s32 1, %v510
    %v512 = vrot.slane %v503, %v511
    %v513 = vlaneseq
    %v514 = vshrl.u32 %v513, 7
    %v515 = vsub.s32 2, %v514
    %v516 = vrot.slane %v503, %v515
    %v517 = vlaneseq
    %v518 = vshrl.u32 %v517, 7
    %v519 = vsub.s32 3, %v518
    %v520 = vrot.slane %v503, %v519
    %v525 = vadd.f32 %v428, %v508
    %v526 = vadd.f32 %v430, %v512
    %v527 = vadd.f32 %v499, %v516
    %v528 = vadd.f32 %v501, %v520
    %v529 = vmul.f32 %v525, 0.5
    %v530 = vtanh.pop %v529
    %v531 = vmul.f32 %v530, 0.5
    %v532 = vadd.f32 %v531, 0.5
    %v533 = vmul.f32 %v526, 0.5
    %v534 = vtanh.pop %v533
    %v535 = vmul.f32 %v534, 0.5
    %v536 = vadd.f32 %v535, 0.5
    %v537 = vtanh.pop %v527
    %v538 = vmul.f32 %v528, 0.5
    %v539 = vtanh.pop %v538
    %v540 = vmul.f32 %v539, 0.5
    %v541 = vadd.f32 %v540, 0.5
    %v542 = vld [vmem:[%s5] sm:$0xff]
    %v543 = vmul.f32 %v542, %v536
    %v544 = vmul.f32 %v532, %v537
    %v545 = vadd.f32 %v543, %v544
    %v546 = vtanh.pop %v545
    %v547 = vmul.f32 %v541, %v546
    %548 = vst [vmem:[#allocation12] sm:$0xff] %v545
    %549 = vst [vmem:[#allocation11] sm:$0xff] %v547
    // Predicated region
    $region46: #{tpu_custom_call.1} parent=1 // pred_check
      _
    $region47: #{tpu_custom_call.1} parent=1 // pred_check_branch
      %551 = sbr.rel (0) target = $region49
    $region48: #{tpu_custom_call.1} parent=1 // pred_region
      %s553 = ssub.s32 128, 128
      %554 = vsyncadd [#allocation4], %s553
      %s556 = sshll.u32 [#allocation11], 4
      %s557 = int_to_ptr.vmem [resolvable:$true] %s556
      %559 = dma.vmem_to_hbm [thread:$0]  %s557, 128, %s6, [#allocation4]
    $region49: #{tpu_custom_call.1} parent=1 // pred_fallthru
      _
    // Predicated region
    $region50: #{tpu_custom_call.1} parent=1 // pred_check
      _
    $region51: #{tpu_custom_call.1} parent=1 // pred_check_branch
      %561 = sbr.rel (0) target = $region53
    $region52: #{tpu_custom_call.1} parent=1 // pred_region
      %s563 = ssub.s32 128, 128
      %564 = vsyncadd [#allocation13], %s563
      %s566 = sshll.u32 [#allocation12], 4
      %s567 = int_to_ptr.vmem [resolvable:$true] %s566
      %569 = dma.vmem_to_hbm [thread:$0]  %s567, 128, %s7, [#allocation13]
    $region53: #{tpu_custom_call.1} parent=1 // pred_fallthru
      _
    // Predicated region
    $region54: #{tpu_custom_call.1} parent=1 // pred_check
      _
    $region55: #{tpu_custom_call.1} parent=1 // pred_check_branch
      %571 = sbr.rel (0) target = $region57
    $region56: #{tpu_custom_call.1} parent=1 // pred_region
      %572 = dma.done [#allocation4], 128
    $region57: #{tpu_custom_call.1} parent=1 // pred_fallthru
      _
    // Predicated region
    $region58: #{tpu_custom_call.1} parent=1 // pred_check
      _
    $region59: #{tpu_custom_call.1} parent=1 // pred_check_branch
      %574 = sbr.rel (0) target = $region61
    $region60: #{tpu_custom_call.1} parent=1 // pred_region
      %575 = dma.done [#allocation13], 128
    $region61: #{tpu_custom_call.1} parent=1 // pred_fallthru
      _
    %576 = vsyncpa [#allocation3], 1
    %577 = vsyncpa [#allocation6], 1
    %578 = vsyncpa [#allocation9], 1
    %579 = vsyncpa [#allocation4], 1
    %580 = vsyncpa [#allocation13], 1

</llo_original>
